<compile_context>
chip_gen: v5e
topology: v5e:2x2
jax: 0.10.0
libtpu: 0.0.40
codegen_flags: <defaults>
</compile_context>

<pallas_src>
import functools

import jax
import jax.numpy as jnp
from jax import lax
from jax.experimental import pallas as pl
from jax.experimental.pallas import tpu as pltpu


def _label_smoothing_kernel(pred_ref, target_ref, loss_ref, *,
                            classes, smoothing, total_n, tile_n):
    confidence = 1.0 - smoothing
    off_value = smoothing / (classes - 1)
    # TODO(synk): matches the provided module (smoothing / (classes - 1)); the
    # smoothing / classes variant would need different weights (sum(w) != 1).

    i = pl.program_id(0)
    last = pl.num_programs(0) - 1

    @pl.when(i == 0)
    def _init():
        loss_ref[...] = jnp.zeros_like(loss_ref)

    logits = pred_ref[...].astype(jnp.float32)            # (TN, C) f32 math
    tgt = target_ref[...]                                 # (TN, 1) int32
    tn, c = logits.shape

    # Numerically stable log-softmax pieces.  The row max is the only XLU lane
    # reduction left; both class-axis sums go to the (otherwise idle) MXU via
    # a ones-vector matmul.
    m = jnp.max(logits, axis=-1, keepdims=True)            # (TN, 1)
    shifted = logits - m                                    # (TN, C)

    ones_c = jnp.ones((c, 1), jnp.float32)
    sum_exp = jnp.dot(jnp.exp(shifted), ones_c,
                      preferred_element_type=jnp.float32)   # (TN, 1), MXU
    lse = jnp.log(sum_exp)                                  # (TN, 1), EUP

    # sum(true_dist) == 1, so:
    #   per_sample = -sum(true_dist * (shifted - lse)) = lse - sum(w * shifted)
    # with w = confidence at the target class and off_value elsewhere
    # (one fused weighted reduction instead of two separate lane reductions).
    class_idx = lax.broadcasted_iota(jnp.int32, (tn, c), 1)
    w = jnp.where(class_idx == tgt, confidence, off_value)  # (TN, C)
    weighted = jnp.dot(shifted * w, ones_c,
                       preferred_element_type=jnp.float32)  # (TN, 1), MXU
    per_sample = lse - weighted                              # (TN, 1)

    remainder = total_n % tile_n                             # static Python int
    if remainder == 0:
        loss_ref[...] += jnp.sum(per_sample)
    else:
        # Only the final (partial) tile pays for the row mask; full tiles skip it.
        @pl.when(i != last)
        def _full_tile():
            loss_ref[...] += jnp.sum(per_sample)

        @pl.when(i == last)
        def _partial_tile():
            row = lax.broadcasted_iota(jnp.int32, (tn, 1), 0)
            # Select (not multiply): garbage/NaN in padded rows cannot propagate.
            masked = jnp.where(row < remainder, per_sample, 0.0)
            loss_ref[...] += jnp.sum(masked)


def _generation_budget():
    """Returns (per-tile pred budget bytes, vmem_limit_bytes), generation-aware."""
    vmem = None
    try:
        info = pltpu.get_tpu_info()
        for name in ("vmem_capacity_bytes", "vmem_bytes", "vmem_size_bytes"):
            vmem = getattr(info, name, None)
            if vmem is not None:
                break
    except Exception:
        vmem = None
    if vmem is not None and vmem >= 100 * 1024 * 1024:
        # v5e / v6e: 128 MiB physical VMEM -> bigger tiles amortize per-step overhead.
        return 4 * 1024 * 1024, 64 * 1024 * 1024
    # v7x (64 MiB VMEM) or unknown: stay conservative.
    return 2 * 1024 * 1024, 32 * 1024 * 1024


def _choose_tile_rows(n, c, itemsize, tile_budget):
    """Batch-tile size from the *true* VMEM footprint: lane axis pads to 128
    (so a (TN, C=10) tile costs TN*128*itemsize, not TN*10*itemsize) and the
    (TN, 1) int32 target tile also occupies a full 128-lane strip.  No
    artificial row cap; sublane-aligned."""
    lane_c = ((c + 127) // 128) * 128
    bytes_per_row = lane_c * itemsize + 128 * 4     # pred row + lane-padded target
    sub = 16 if itemsize < 4 else 8                 # bf16 packs 16 rows / vreg
    tn = tile_budget // bytes_per_row
    tn = max(sub, (tn // sub) * sub)
    if n <= tn:
        return n                                    # single full block (always legal)
    return tn


def label_smoothing_loss(pred, target, *, classes=10, smoothing=0.1, tile_n=None):
    """pred: (N, classes) float (f32 or bf16); target: (N,) int. Returns scalar f32."""
    n, c = pred.shape
    assert c == classes
    assert classes >= 2, "label smoothing needs at least 2 classes"
    target2d = target.astype(jnp.int32).reshape(n, 1)

    tile_budget, vmem_limit = _generation_budget()
    if tile_n is None:
        tile_n = _choose_tile_rows(n, c, jnp.dtype(pred.dtype).itemsize, tile_budget)
    num_tiles = pl.cdiv(n, tile_n)

    kernel = functools.partial(
        _label_smoothing_kernel,
        classes=classes, smoothing=smoothing, total_n=n, tile_n=tile_n)

    total = pl.pallas_call(
        kernel,
        out_shape=jax.ShapeDtypeStruct((1, 1), jnp.float32),
        grid_spec=pltpu.PrefetchScalarGridSpec(
            num_scalar_prefetch=0,
            grid=(num_tiles,),
            in_specs=[
                pl.BlockSpec((tile_n, c), lambda i: (i, 0)),   # pred tile
                pl.BlockSpec((tile_n, 1), lambda i: (i, 0)),   # target tile
            ],
            # Same (1, 1) block every step -> scalar accumulator stays resident
            # in VMEM across the whole grid; zero per-sample HBM writeback.
            out_specs=pl.BlockSpec((1, 1), lambda i: (0, 0)),
        ),
        compiler_params=pltpu.CompilerParams(
            dimension_semantics=("arbitrary",),   # accumulator axis must be arbitrary
            vmem_limit_bytes=vmem_limit,
        ),
    )(pred, target2d)

    # Mean over the *global* batch size in plain JAX.
    return total[0, 0] / jnp.float32(n)


def _reference(pred, target, *, classes=10, smoothing=0.1):
    confidence = 1.0 - smoothing
    logp = jax.nn.log_softmax(pred.astype(jnp.float32), axis=-1)
    true_dist = jnp.full_like(logp, smoothing / (classes - 1))
    true_dist = true_dist.at[jnp.arange(pred.shape[0]), target].set(confidence)
    return jnp.mean(jnp.sum(-true_dist * logp, axis=-1))


if __name__ == "__main__":
    key = jax.random.PRNGKey(0)
    k1, k2, k3, k4 = jax.random.split(key, 4)

    # Small shape matching the module (classes=10).
    N, CLASSES = 8, 10
    pred = jax.random.normal(k1, (N, CLASSES), dtype=jnp.float32)
    target = jax.random.randint(k2, (N,), 0, CLASSES, dtype=jnp.int32)

    loss = label_smoothing_loss(pred, target, classes=CLASSES, smoothing=0.1)
    jax.block_until_ready(loss)
    ref = _reference(pred, target, classes=CLASSES, smoothing=0.1)
    assert jnp.allclose(loss, ref, atol=1e-5, rtol=1e-5), (loss, ref)

    # Exercise the tiled accumulator path with a partial last tile.
    N2 = 20
    pred2 = jax.random.normal(k3, (N2, CLASSES), dtype=jnp.float32)
    target2 = jax.random.randint(k4, (N2,), 0, CLASSES, dtype=jnp.int32)
    loss2 = label_smoothing_loss(pred2, target2, classes=CLASSES, smoothing=0.1,
                                 tile_n=8)
    jax.block_until_ready(loss2)
    ref2 = _reference(pred2, target2, classes=CLASSES, smoothing=0.1)
    assert jnp.allclose(loss2, ref2, atol=1e-5, rtol=1e-5), (loss2, ref2)

    print("KERNEL_OK")
</pallas_src>

<mosaic_0001>
module attributes {stable_mosaic.version = 11 : i64} {
  func.func @_label_smoothing_kernel(%arg0: i32, %arg1: memref<8x10xf32, #tpu.memory_space<vmem>>, %arg2: memref<8x1xi32, #tpu.memory_space<vmem>>, %arg3: memref<1x1xf32, #tpu.memory_space<vmem>>) attributes {dimension_semantics = [#tpu.dimension_semantics<arbitrary>], iteration_bounds = array<i64: 1>, scalar_prefetch = 0 : i64, scratch_operands = 0 : i64, tpu.core_type = #tpu.core_type<tc>, window_params = [{transform_indices = @transform_0, window_bounds = array<i64: 8, 10>}, {transform_indices = @transform_1, window_bounds = array<i64: 8, 1>}, {pipeline_mode = #tpu.pipeline_mode<synchronous>, transform_indices = @transform_2, window_bounds = array<i64: 1, 1>}]} {
    %c0_i32 = arith.constant 0 : i32
    %0 = arith.cmpi eq, %arg0, %c0_i32 : i32
    %1 = arith.extui %0 : i1 to i32
    %c0_i32_0 = arith.constant 0 : i32
    %2 = arith.cmpi ne, %1, %c0_i32_0 : i32
    scf.if %2 {
      %cst_14 = arith.constant 0.000000e+00 : f32
      %30 = vector.broadcast %cst_14 : f32 to vector<1x1xf32>
      %c0_15 = arith.constant 0 : index
      %c0_16 = arith.constant 0 : index
      %31 = vector.load %arg3[%c0_15, %c0_16] : memref<1x1xf32, #tpu.memory_space<vmem>>, vector<1x1xf32>
      tpu.vector_store %arg3[%c0_15, %c0_16], %30 {strides = array<i32>} : memref<1x1xf32, #tpu.memory_space<vmem>>, vector<1x1xf32>,
    } else {
    }
    %c0 = arith.constant 0 : index
    %c0_1 = arith.constant 0 : index
    %3 = vector.load %arg1[%c0, %c0_1] : memref<8x10xf32, #tpu.memory_space<vmem>>, vector<8x10xf32>
    %c0_2 = arith.constant 0 : index
    %c0_3 = arith.constant 0 : index
    %4 = vector.load %arg2[%c0_2, %c0_3] : memref<8x1xi32, #tpu.memory_space<vmem>>, vector<8x1xi32>
    %cst = arith.constant dense<0xFF800000> : vector<8xf32>
    %5 = vector.multi_reduction <maximumf>, %3, %cst [1] : vector<8x10xf32> to vector<8xf32>
    %6 = vector.shape_cast %5 : vector<8xf32> to vector<8x1xf32>
    %7 = vector.broadcast %6 : vector<8x1xf32> to vector<8x10xf32>
    %8 = arith.subf %3, %7 : vector<8x10xf32>
    %cst_4 = arith.constant 1.000000e+00 : f32
    %9 = vector.broadcast %cst_4 : f32 to vector<10x1xf32>
    %10 = math.exp %8 : vector<8x10xf32>
    %cst_5 = arith.constant dense<0.000000e+00> : vector<8x1xf32>
    %11 = tpu.matmul %10, %9, %cst_5 {dimension_numbers = #tpu.dot_dimension_numbers<[1], [0], [0], [1], [0, 0, 1, 1], [], []>} : vector<8x10xf32>, vector<10x1xf32>, vector<8x1xf32> -> vector<8x1xf32>
    %12 = math.log %11 : vector<8x1xf32>
    %13 = tpu.iota {dimensions = array<i32: 1>} : vector<8x10xi32>
    %14 = vector.broadcast %4 : vector<8x1xi32> to vector<8x10xi32>
    %15 = arith.cmpi eq, %13, %14 : vector<8x10xi32>
    %cst_6 = arith.constant 0.899999976 : f32
    %cst_7 = arith.constant 0.0111111114 : f32
    %16 = vector.broadcast %cst_6 : f32 to vector<8x10xf32>
    %17 = vector.broadcast %cst_7 : f32 to vector<8x10xf32>
    %18 = arith.select %15, %16, %17 : vector<8x10xi1>, vector<8x10xf32>
    %19 = arith.mulf %8, %18 : vector<8x10xf32>
    %cst_8 = arith.constant dense<0.000000e+00> : vector<8x1xf32>
    %20 = tpu.matmul %19, %9, %cst_8 {dimension_numbers = #tpu.dot_dimension_numbers<[1], [0], [0], [1], [0, 0, 1, 1], [], []>} : vector<8x10xf32>, vector<10x1xf32>, vector<8x1xf32> -> vector<8x1xf32>
    %21 = arith.subf %12, %20 : vector<8x1xf32>
    %c0_9 = arith.constant 0 : index
    %c0_10 = arith.constant 0 : index
    %22 = vector.load %arg3[%c0_9, %c0_10] : memref<1x1xf32, #tpu.memory_space<vmem>>, vector<1x1xf32>
    %23 = vector.shape_cast %21 : vector<8x1xf32> to vector<1x8x1xf32>
    %cst_11 = arith.constant dense<0.000000e+00> : vector<1xf32>
    %24 = vector.multi_reduction <add>, %23, %cst_11 [1, 2] : vector<1x8x1xf32> to vector<1xf32>
    %25 = vector.shape_cast %24 : vector<1xf32> to vector<1x1x1xf32>
    %26 = vector.extract %25[0, 0, 0] : f32 from vector<1x1x1xf32>
    %27 = vector.broadcast %26 : f32 to vector<1x1xf32>
    %28 = arith.addf %22, %27 : vector<1x1xf32>
    %c0_12 = arith.constant 0 : index
    %c0_13 = arith.constant 0 : index
    %29 = vector.load %arg3[%c0_12, %c0_13] : memref<1x1xf32, #tpu.memory_space<vmem>>, vector<1x1xf32>
    tpu.vector_store %arg3[%c0_12, %c0_13], %28 {strides = array<i32>} : memref<1x1xf32, #tpu.memory_space<vmem>>, vector<1x1xf32>,
    return
  }
  func.func @transform_0(%arg0: i32) -> (i32, i32) {
    %c0_i32 = arith.constant 0 : i32
    %c0_i32_0 = arith.constant 0 : i32
    return %arg0, %c0_i32 : i32, i32
  }
  func.func @transform_1(%arg0: i32) -> (i32, i32) {
    %c0_i32 = arith.constant 0 : i32
    %c0_i32_0 = arith.constant 0 : i32
    return %arg0, %c0_i32 : i32, i32
  }
  func.func @transform_2(%arg0: i32) -> (i32, i32) {
    %c0_i32 = arith.constant 0 : i32
    %c0_i32_0 = arith.constant 0 : i32
    %c0_i32_1 = arith.constant 0 : i32
    return %c0_i32, %c0_i32_0 : i32, i32
  }
}

</mosaic_0001>

<llo_original>
// kernel: tpu_custom_call.1
$region0: #{tpu_custom_call.1}
  #allocation0 [shape = 'u32[]', space=smem, size = 0x4, offset = 0x4, fixed_abs, tag = 'smem constant byte address 0x4 - core index']
  #allocation1 [shape = 'u32[72,128]{1,0:T(1,128)}', space=vmem, size = 0x9000, scoped, tag = 'internal scratch']
  %s0 = inlined_call_operand.vmem [shape: f32[8,10], index: 0, kind: input, shape index: {}]
  %s1 = inlined_call_operand.vmem [shape: s32[8,1], index: 1, kind: input, shape index: {}]
  %s2 = inlined_call_operand.hbm [shape: f32[1,1], index: 2, kind: output, shape index: {}]
  %s3 = sld [smem:[#allocation0]]
  $region22: #{tpu_custom_call.1} parent=0
    _
  %s5 = ssub.s32 1, %s3
  %s6 = scalar_select 0, %s5, %s3
  $region1: #{tpu_custom_call.1} parent=0
    #allocation2 [shape = 'u8[512]{0}', space=vmem, size = 0x400, scoped, tag = 'output window, operand 0, single buffered']
    #allocation3 [shape = 's32[1]{0}', space=sflag, size = 0x4, scoped, tag = 'scoped memory for tpu_custom_call.1']
    %7 = vsyncpa [#allocation3], 0
    // Predicated region
    $region2: #{tpu_custom_call.1} parent=1 // pred_check
      _
    $region3: #{tpu_custom_call.1} parent=1 // pred_check_branch
      %9 = sbr.rel (0) target = $region5
    $region4: #{tpu_custom_call.1} parent=1 // pred_region
      _
    $region5: #{tpu_custom_call.1} parent=1 // pred_fallthru
      _
    // Predicated region
    $region6: #{tpu_custom_call.1} parent=1 // pred_check
      _
    $region7: #{tpu_custom_call.1} parent=1 // pred_check_branch
      %11 = sbr.rel (0) target = $region9
    $region8: #{tpu_custom_call.1} parent=1 // pred_region
      _
    $region9: #{tpu_custom_call.1} parent=1 // pred_fallthru
      _
    %p12 = scmp.eq.s32.totalorder 0, 0
    // Predicated region
    $region10: #{tpu_custom_call.1} parent=1 // pred_check
      %p13 = pneg %p12
    $region11: #{tpu_custom_call.1} parent=1 // pred_check_branch
      %15 = sbr.rel (%p13) target = $region13
    $region12: #{tpu_custom_call.1} parent=1 // pred_region
      %vm16 = vcmask 0
      %17 = vst.msk [vmem:[#allocation2] sm:$0x1] %vm16, 0.0
    $region13: #{tpu_custom_call.1} parent=1 // pred_fallthru
      _
    %v18 = vld [vmem:[%s0] sm:$0xff]
    %v19 = vld [vmem:[%s1] sm:$0xff]
    %vm20 = vcmask 80896
    %v21 = vsel %vm20, %v18, -inf
    %22 = vmax.xlane.f32.xlu0 %v21
    %v23 = vpop.xlane.xlu0 %22
    %v24 = vsub.f32 %v18, %v23
    %v25 = vmul.f32 %v24, 1.442695
    %v26 = vpow.pop %v25
    %v28 = vsel %vm20, %v26, 0
    %vm30 = vcmask 1041408
    %v32 = vsel %vm30, 1.0, 0
    %34 = vmatpush.msra.mxu0 0.0
    %35 = vmatpush.msra.mxu0 0.0
    %36 = vmatpush.msra.mxu0 0.0
    %37 = vmatpush.msra.mxu0 0.0
    %38 = vmatpush.msra.mxu0 0.0
    %39 = vmatpush.msra.mxu0 0.0
    %40 = vmatpush.msra.mxu0 0.0
    %41 = vmatpush.msra.mxu0 0.0
    %42 = vmatpush.msra.mxu0 0.0
    %43 = vmatpush.msra.mxu0 0.0
    %44 = vmatpush.msra.mxu0 0.0
    %45 = vmatpush.msra.mxu0 0.0
    %46 = vmatpush.msra.mxu0 0.0
    %47 = vmatpush.msra.mxu0 0.0
    %48 = vmatpush.msra.mxu0 %v32
    %49 = vmatpush.msra.mxu0 1.0
    %50 = vmatmul.f32.gmra.mxu0 %v28
    %v51 = vpop.f32.mrf.mxu0
    %v52 = vadd.f32 0.0, %v51
    %53 = vdwg.mxu0
    %v54 = vlog2.pop %v52
    %v55 = vmul.f32 %v54, 0.6931472
    %v56 = vlaneseq
    %v57 = vand.u32 %v56, 127
    %58 = vset.pattern.permute.xlu0 0
    %59 = vperm.xlu0 %58, %v19
    %v60 = vpop.permute.xlu0 %59
    %vm61 = vcmp.eq.s32.totalorder %v57, %v60
    %v62 = vsel %vm61, 0.9, 0.011111111
    %v63 = vmul.f32 %v24, %v62
    %v65 = vsel %vm20, %v63, 0
    %67 = vmatpush.msra.mxu0 0.0
    %68 = vmatpush.msra.mxu0 0.0
    %69 = vmatpush.msra.mxu0 0.0
    %70 = vmatpush.msra.mxu0 0.0
    %71 = vmatpush.msra.mxu0 0.0
    %72 = vmatpush.msra.mxu0 0.0
    %73 = vmatpush.msra.mxu0 0.0
    %74 = vmatpush.msra.mxu0 0.0
    %75 = vmatpush.msra.mxu0 0.0
    %76 = vmatpush.msra.mxu0 0.0
    %77 = vmatpush.msra.mxu0 0.0
    %78 = vmatpush.msra.mxu0 0.0
    %79 = vmatpush.msra.mxu0 0.0
    %80 = vmatpush.msra.mxu0 0.0
    %81 = vmatpush.msra.mxu0 %v32
    %82 = vmatpush.msra.mxu0 1.0
    %83 = vmatmul.f32.gmra.mxu0 %v65
    %v84 = vpop.f32.mrf.mxu0
    %v85 = vadd.f32 0.0, %v84
    %86 = vdwg.mxu0
    %v87 = vsub.f32 %v55, %v85
    %v88 = vld [vmem:[#allocation2] sm:$0x1]
    %vm89 = vcmask 7168
    %v90 = vsel %vm89, %v87, 0.0
    %91 = vadd.xlane.f32.xlu0 %v90
    %v92 = vpop.xlane.xlu0 %91
    %v93 = vrot.slane %v92, 4
    %v94 = vadd.f32 %v92, %v93
    %v95 = vrot.slane %v94, 2
    %v96 = vadd.f32 %v94, %v95
    %v97 = vrot.slane %v96, 1
    %v98 = vadd.f32 %v96, %v97
    %s99 = vtos %v98
    %v100 = vstv %s99
    %v101 = vadd.f32 %v88, %v100
    %vm102 = vcmask 0
    %103 = vst.msk [vmem:[#allocation2] sm:$0x1] %vm102, %v101
    // Predicated region
    $region14: #{tpu_custom_call.1} parent=1 // pred_check
      _
    $region15: #{tpu_custom_call.1} parent=1 // pred_check_branch
      %105 = sbr.rel (0) target = $region17
    $region16: #{tpu_custom_call.1} parent=1 // pred_region
      %107 = vsyncadd [#allocation3], 0
      %s109 = sshll.u32 [#allocation2], 4
      %s110 = int_to_ptr.vmem [resolvable:$true] %s109
      %s111 = sshll.u32 %s2, 4
      %s112 = int_to_ptr.hbm [resolvable:$true] %s111
      %114 = dma.vmem_to_hbm [thread:$0]  %s110, 16, %s112, [#allocation3]
    $region17: #{tpu_custom_call.1} parent=1 // pred_fallthru
      _
    // Predicated region
    $region18: #{tpu_custom_call.1} parent=1 // pred_check
      _
    $region19: #{tpu_custom_call.1} parent=1 // pred_check_branch
      %116 = sbr.rel (0) target = $region21
    $region20: #{tpu_custom_call.1} parent=1 // pred_region
      %118 = dma.done [#allocation3], 16
    $region21: #{tpu_custom_call.1} parent=1 // pred_fallthru
      _
    %119 = vsyncpa [#allocation3], 1

</llo_original>
